<compile_context>
chip_gen: v5e
topology: v5e:2x2
jax: 0.10.0
libtpu: 0.0.40
codegen_flags: <defaults>
</compile_context>

<pallas_src>
import jax
import jax.numpy as jnp
from jax.experimental import pallas as pl
from jax.experimental.pallas import tpu as pltpu

BN_EPS = 1e-5


def _mlp_kernel(xT_ref, w1t_ref, b1_ref, w2t_ref, b2_ref, w3t_ref, b3_ref, o_ref):
    wdt = w1t_ref.dtype

    # Layer 1: Linear(D, 64) + ReLU         (BN1 is folded into layer-2 weights)
    # (64, D) @ (D, TB) -> (64, TB), f32 accumulate, f32 bias.
    h = jnp.dot(w1t_ref[...], xT_ref[...],
                preferred_element_type=jnp.float32) + b1_ref[...]
    h = jnp.maximum(h, 0.0)
    # Dropout(0.2): identity in eval mode.

    # Layer 2: Linear(64, 32) + ReLU        (BN2 is folded into layer-3 weights)
    # (32, 64) @ (64, TB) -> (32, TB)
    h = jnp.dot(w2t_ref[...], h.astype(wdt),
                preferred_element_type=jnp.float32) + b2_ref[...]
    h = jnp.maximum(h, 0.0)
    # Dropout(0.1): identity in eval mode.

    # Layer 3: Linear(32, 1) -> lane-dense (1, TB) output row.
    o_ref[...] = jnp.dot(w3t_ref[...], h.astype(wdt),
                         preferred_element_type=jnp.float32) + b3_ref[...]


def _round_up(n, m):
    return ((n + m - 1) // m) * m


def fold_bn_params(p, *, compute_dtype=jnp.bfloat16):
    """One-time parameter prep (in f32): fold eval-mode BN into the following Linear,
    pre-transpose everything for the batch-on-lanes orientation, and cast weights to
    `compute_dtype` (biases stay f32)."""
    s1 = p["g1"] / jnp.sqrt(p["v1"] + BN_EPS)          # (1, 64)
    t1 = p["be1"] - s1 * p["m1"]                       # (1, 64)
    s2 = p["g2"] / jnp.sqrt(p["v2"] + BN_EPS)          # (1, 32)
    t2 = p["be2"] - s2 * p["m2"]                       # (1, 32)
    w2f = p["w2"] * s1.T                               # (64, 32), rows scaled by s1
    b2f = t1 @ p["w2"] + p["b2"]                       # (1, 32)
    w3f = p["w3"] * s2.T                               # (32, 1), rows scaled by s2
    b3f = t2 @ p["w3"] + p["b3"]                       # (1, 1)
    return {
        "w1t": jnp.transpose(p["w1"]).astype(compute_dtype),   # (64, D)
        "b1":  jnp.transpose(p["b1"]).astype(jnp.float32),     # (64, 1)
        "w2t": jnp.transpose(w2f).astype(compute_dtype),       # (32, 64)
        "b2":  jnp.transpose(b2f).astype(jnp.float32),         # (32, 1)
        "w3t": jnp.transpose(w3f).astype(compute_dtype),       # (1, 32)
        "b3":  b3f.astype(jnp.float32),                        # (1, 1)
    }


def feed_forward_net(x, fp, *, tb_max=4096):
    """x: (B, input_dim) float32, fp: folded/transposed params -> (B, 1) float32."""
    B, D = x.shape
    cdt = fp["w1t"].dtype

    # Batch tile: multiple of 256 (lane-dense, unmasked output stores), capped at
    # tb_max, and tied to B so small batches are not padded to a huge tile.
    tb = min(tb_max, _round_up(B, 256))
    b_pad = _round_up(B, tb)

    # Pad the batch tail, cast to the compute dtype, transpose once in the wrapper so
    # the kernel sees a lane-dense (D, B_pad) slab with the batch on the lane axis.
    xT = jnp.transpose(jnp.pad(x, ((0, b_pad - B), (0, 0))).astype(cdt))   # (D, b_pad)

    grid = (b_pad // tb,)
    const = lambda i: (0, 0)                           # weights stay VMEM-resident

    out = pl.pallas_call(
        _mlp_kernel,
        out_shape=jax.ShapeDtypeStruct((1, b_pad), jnp.float32),
        grid=grid,
        in_specs=[
            pl.BlockSpec((D, tb), lambda i: (0, i)),   # x^T: batch-tiled, pipelined
            pl.BlockSpec((64, D), const),              # w1^T
            pl.BlockSpec((64, 1), const),              # b1
            pl.BlockSpec((32, 64), const),             # w2^T (BN1 folded)
            pl.BlockSpec((32, 1), const),              # b2  (BN1 folded)
            pl.BlockSpec((1, 32), const),              # w3^T (BN2 folded)
            pl.BlockSpec((1, 1), const),               # b3  (BN2 folded)
        ],
        out_specs=pl.BlockSpec((1, tb), lambda i: (0, i)),
        compiler_params=pltpu.CompilerParams(
            dimension_semantics=("parallel",)),
    )(xT, fp["w1t"], fp["b1"], fp["w2t"], fp["b2"], fp["w3t"], fp["b3"])

    return out[0, :B][:, None]                         # (1, B_pad) -> (B, 1)


def init_params(key, input_dim):
    """Parameter shapes mirroring the PyTorch module. BN stats are randomized to
    simulate a trained model (PyTorch init would be gamma=1, beta=0, mean=0, var=1)."""
    ks = jax.random.split(key, 14)

    def linear_init(kw, kb, fan_in, fan_out):
        bound = 1.0 / jnp.sqrt(fan_in)
        w = jax.random.uniform(kw, (fan_in, fan_out), jnp.float32, -bound, bound)
        b = jax.random.uniform(kb, (1, fan_out), jnp.float32, -bound, bound)
        return w, b

    w1, b1 = linear_init(ks[0], ks[1], input_dim, 64)
    w2, b2 = linear_init(ks[2], ks[3], 64, 32)
    w3, b3 = linear_init(ks[4], ks[5], 32, 1)

    return {
        "w1": w1, "b1": b1,
        "g1": jax.random.uniform(ks[6], (1, 64), jnp.float32, 0.5, 1.5),
        "be1": 0.1 * jax.random.normal(ks[7], (1, 64), jnp.float32),
        "m1": 0.1 * jax.random.normal(ks[8], (1, 64), jnp.float32),
        "v1": jax.random.uniform(ks[9], (1, 64), jnp.float32, 0.5, 1.5),
        "w2": w2, "b2": b2,
        "g2": jax.random.uniform(ks[10], (1, 32), jnp.float32, 0.5, 1.5),
        "be2": 0.1 * jax.random.normal(ks[11], (1, 32), jnp.float32),
        "m2": 0.1 * jax.random.normal(ks[12], (1, 32), jnp.float32),
        "v2": jax.random.uniform(ks[13], (1, 32), jnp.float32, 0.5, 1.5),
        "w3": w3, "b3": b3,
    }


def _reference(x, p):
    """Pure-JAX f32 reference (unfolded params, exact module ordering, eval mode)."""
    h = jnp.maximum(x @ p["w1"] + p["b1"], 0.0)
    h = (h - p["m1"]) / jnp.sqrt(p["v1"] + BN_EPS) * p["g1"] + p["be1"]
    h = jnp.maximum(h @ p["w2"] + p["b2"], 0.0)
    h = (h - p["m2"]) / jnp.sqrt(p["v2"] + BN_EPS) * p["g2"] + p["be2"]
    return h @ p["w3"] + p["b3"]


def _folded_reference(x, fp):
    """Reference that mirrors the kernel's folded/quantized compute exactly
    (same dtype casts, f32 accumulation) for tight checks on the bf16 path."""
    dt = fp["w1t"].dtype
    h = jnp.dot(x.astype(dt), fp["w1t"].T,
                preferred_element_type=jnp.float32) + fp["b1"].T
    h = jnp.maximum(h, 0.0)
    h = jnp.dot(h.astype(dt), fp["w2t"].T,
                preferred_element_type=jnp.float32) + fp["b2"].T
    h = jnp.maximum(h, 0.0)
    return jnp.dot(h.astype(dt), fp["w3t"].T,
                   preferred_element_type=jnp.float32) + fp["b3"]


if __name__ == "__main__":
    key = jax.random.PRNGKey(0)
    k_x, k_x2, k_p = jax.random.split(key, 3)

    INPUT_DIM = 16
    params = init_params(k_p, INPUT_DIM)

    # --- Exact f32 path: kernel vs unfolded PyTorch-ordering reference -------------
    folded_f32 = fold_bn_params(params, compute_dtype=jnp.float32)

    B = 8
    x = jax.random.normal(k_x, (B, INPUT_DIM), jnp.float32)
    out = jax.block_until_ready(feed_forward_net(x, folded_f32))
    ref = _reference(x, params)
    assert out.shape == (B, 1), out.shape
    assert jnp.allclose(out, ref, atol=1e-4, rtol=1e-5), "mismatch vs reference (B=8)"

    # Multi-step / non-multiple tail padding check.
    B2 = 1000
    x2 = jax.random.normal(k_x2, (B2, INPUT_DIM), jnp.float32)
    out2 = jax.block_until_ready(feed_forward_net(x2, folded_f32))
    ref2 = _reference(x2, params)
    assert out2.shape == (B2, 1), out2.shape
    assert jnp.allclose(out2, ref2, atol=1e-4, rtol=1e-5), "mismatch vs reference (B=1000)"

    # --- Production bf16 path: kernel vs bf16-quantized folded reference -----------
    folded_bf16 = fold_bn_params(params, compute_dtype=jnp.bfloat16)
    out3 = jax.block_until_ready(feed_forward_net(x2, folded_bf16))
    ref3 = _folded_reference(x2, folded_bf16)
    assert out3.shape == (B2, 1), out3.shape
    assert jnp.allclose(out3, ref3, atol=1e-3, rtol=1e-3), "mismatch on bf16 path (B=1000)"

    print("KERNEL_OK")
</pallas_src>

<mosaic_0001>
module attributes {stable_mosaic.version = 11 : i64} {
  func.func @_mlp_kernel(%arg0: i32, %arg1: memref<16x256xf32, #tpu.memory_space<vmem>>, %arg2: memref<64x16xf32, #tpu.memory_space<vmem>>, %arg3: memref<64x1xf32, #tpu.memory_space<vmem>>, %arg4: memref<32x64xf32, #tpu.memory_space<vmem>>, %arg5: memref<32x1xf32, #tpu.memory_space<vmem>>, %arg6: memref<1x32xf32, #tpu.memory_space<vmem>>, %arg7: memref<1x1xf32, #tpu.memory_space<vmem>>, %arg8: memref<1x256xf32, #tpu.memory_space<vmem>>) attributes {dimension_semantics = [#tpu.dimension_semantics<parallel>], iteration_bounds = array<i64: 1>, scalar_prefetch = 0 : i64, scratch_operands = 0 : i64, tpu.core_type = #tpu.core_type<tc>, window_params = [{transform_indices = @transform_0, window_bounds = array<i64: 16, 256>}, {pipeline_mode = #tpu.pipeline_mode<synchronous>, transform_indices = @transform_1, window_bounds = array<i64: 64, 16>}, {pipeline_mode = #tpu.pipeline_mode<synchronous>, transform_indices = @transform_2, window_bounds = array<i64: 64, 1>}, {pipeline_mode = #tpu.pipeline_mode<synchronous>, transform_indices = @transform_3, window_bounds = array<i64: 32, 64>}, {pipeline_mode = #tpu.pipeline_mode<synchronous>, transform_indices = @transform_4, window_bounds = array<i64: 32, 1>}, {pipeline_mode = #tpu.pipeline_mode<synchronous>, transform_indices = @transform_5, window_bounds = array<i64: 1, 32>}, {pipeline_mode = #tpu.pipeline_mode<synchronous>, transform_indices = @transform_6, window_bounds = array<i64: 1, 1>}, {transform_indices = @transform_7, window_bounds = array<i64: 1, 256>}]} {
    %c0 = arith.constant 0 : index
    %c0_0 = arith.constant 0 : index
    %0 = vector.load %arg2[%c0, %c0_0] : memref<64x16xf32, #tpu.memory_space<vmem>>, vector<64x16xf32>
    %c0_1 = arith.constant 0 : index
    %c0_2 = arith.constant 0 : index
    %1 = vector.load %arg1[%c0_1, %c0_2] : memref<16x256xf32, #tpu.memory_space<vmem>>, vector<16x256xf32>
    %cst = arith.constant dense<0.000000e+00> : vector<64x256xf32>
    %2 = tpu.matmul %0, %1, %cst {dimension_numbers = #tpu.dot_dimension_numbers<[1], [0], [0], [1], [0, 0, 1, 1], [], []>} : vector<64x16xf32>, vector<16x256xf32>, vector<64x256xf32> -> vector<64x256xf32>
    %c0_3 = arith.constant 0 : index
    %c0_4 = arith.constant 0 : index
    %3 = vector.load %arg3[%c0_3, %c0_4] : memref<64x1xf32, #tpu.memory_space<vmem>>, vector<64x1xf32>
    %4 = vector.broadcast %3 : vector<64x1xf32> to vector<64x256xf32>
    %5 = arith.addf %2, %4 : vector<64x256xf32>
    %cst_5 = arith.constant 0.000000e+00 : f32
    %6 = vector.broadcast %cst_5 : f32 to vector<64x256xf32>
    %7 = arith.maximumf %5, %6 : vector<64x256xf32>
    %c0_6 = arith.constant 0 : index
    %c0_7 = arith.constant 0 : index
    %8 = vector.load %arg4[%c0_6, %c0_7] : memref<32x64xf32, #tpu.memory_space<vmem>>, vector<32x64xf32>
    %cst_8 = arith.constant dense<0.000000e+00> : vector<32x256xf32>
    %9 = tpu.matmul %8, %7, %cst_8 {dimension_numbers = #tpu.dot_dimension_numbers<[1], [0], [0], [1], [0, 0, 1, 1], [], []>} : vector<32x64xf32>, vector<64x256xf32>, vector<32x256xf32> -> vector<32x256xf32>
    %c0_9 = arith.constant 0 : index
    %c0_10 = arith.constant 0 : index
    %10 = vector.load %arg5[%c0_9, %c0_10] : memref<32x1xf32, #tpu.memory_space<vmem>>, vector<32x1xf32>
    %11 = vector.broadcast %10 : vector<32x1xf32> to vector<32x256xf32>
    %12 = arith.addf %9, %11 : vector<32x256xf32>
    %cst_11 = arith.constant 0.000000e+00 : f32
    %13 = vector.broadcast %cst_11 : f32 to vector<32x256xf32>
    %14 = arith.maximumf %12, %13 : vector<32x256xf32>
    %c0_12 = arith.constant 0 : index
    %c0_13 = arith.constant 0 : index
    %15 = vector.load %arg6[%c0_12, %c0_13] : memref<1x32xf32, #tpu.memory_space<vmem>>, vector<1x32xf32>
    %cst_14 = arith.constant dense<0.000000e+00> : vector<1x256xf32>
    %16 = tpu.matmul %15, %14, %cst_14 {dimension_numbers = #tpu.dot_dimension_numbers<[1], [0], [0], [1], [0, 0, 1, 1], [], []>} : vector<1x32xf32>, vector<32x256xf32>, vector<1x256xf32> -> vector<1x256xf32>
    %c0_15 = arith.constant 0 : index
    %c0_16 = arith.constant 0 : index
    %17 = vector.load %arg7[%c0_15, %c0_16] : memref<1x1xf32, #tpu.memory_space<vmem>>, vector<1x1xf32>
    %18 = vector.broadcast %17 : vector<1x1xf32> to vector<1x256xf32>
    %19 = arith.addf %16, %18 : vector<1x256xf32>
    %c0_17 = arith.constant 0 : index
    %c0_18 = arith.constant 0 : index
    %20 = vector.load %arg8[%c0_17, %c0_18] : memref<1x256xf32, #tpu.memory_space<vmem>>, vector<1x256xf32>
    tpu.vector_store %arg8[%c0_17, %c0_18], %19 {strides = array<i32>} : memref<1x256xf32, #tpu.memory_space<vmem>>, vector<1x256xf32>,
    return
  }
  func.func @transform_0(%arg0: i32) -> (i32, i32) {
    %c0_i32 = arith.constant 0 : i32
    %c0_i32_0 = arith.constant 0 : i32
    return %c0_i32, %arg0 : i32, i32
  }
  func.func @transform_1(%arg0: i32) -> (i32, i32) {
    %c0_i32 = arith.constant 0 : i32
    %c0_i32_0 = arith.constant 0 : i32
    %c0_i32_1 = arith.constant 0 : i32
    return %c0_i32, %c0_i32_0 : i32, i32
  }
  func.func @transform_2(%arg0: i32) -> (i32, i32) {
    %c0_i32 = arith.constant 0 : i32
    %c0_i32_0 = arith.constant 0 : i32
    %c0_i32_1 = arith.constant 0 : i32
    return %c0_i32, %c0_i32_0 : i32, i32
  }
  func.func @transform_3(%arg0: i32) -> (i32, i32) {
    %c0_i32 = arith.constant 0 : i32
    %c0_i32_0 = arith.constant 0 : i32
    %c0_i32_1 = arith.constant 0 : i32
    return %c0_i32, %c0_i32_0 : i32, i32
  }
  func.func @transform_4(%arg0: i32) -> (i32, i32) {
    %c0_i32 = arith.constant 0 : i32
    %c0_i32_0 = arith.constant 0 : i32
    %c0_i32_1 = arith.constant 0 : i32
    return %c0_i32, %c0_i32_0 : i32, i32
  }
  func.func @transform_5(%arg0: i32) -> (i32, i32) {
    %c0_i32 = arith.constant 0 : i32
    %c0_i32_0 = arith.constant 0 : i32
    %c0_i32_1 = arith.constant 0 : i32
    return %c0_i32, %c0_i32_0 : i32, i32
  }
  func.func @transform_6(%arg0: i32) -> (i32, i32) {
    %c0_i32 = arith.constant 0 : i32
    %c0_i32_0 = arith.constant 0 : i32
    %c0_i32_1 = arith.constant 0 : i32
    return %c0_i32, %c0_i32_0 : i32, i32
  }
  func.func @transform_7(%arg0: i32) -> (i32, i32) {
    %c0_i32 = arith.constant 0 : i32
    %c0_i32_0 = arith.constant 0 : i32
    return %c0_i32, %arg0 : i32, i32
  }
}

</mosaic_0001>

<llo_original>
// kernel: tpu_custom_call.1
$region0: #{tpu_custom_call.1}
  #allocation0 [shape = 'u32[]', space=smem, size = 0x4, offset = 0x4, fixed_abs, tag = 'smem constant byte address 0x4 - core index']
  #allocation1 [shape = 'u32[72,128]{1,0:T(1,128)}', space=vmem, size = 0x9000, scoped, tag = 'internal scratch']
  #allocation2 [shape = 'f32[1,1]{1,0:T(1,128)S(1)}', space=vmem, size = 0x200, scoped, tag = 'scoped memory for tpu_custom_call.1']
  %s0 = inlined_call_operand.vmem [shape: f32[16,256], index: 0, kind: input, shape index: {}]
  %s1 = inlined_call_operand.vmem [shape: f32[64,16], index: 1, kind: input, shape index: {}]
  %s2 = inlined_call_operand.vmem [shape: f32[64,1], index: 2, kind: input, shape index: {}]
  %s3 = inlined_call_operand.vmem [shape: f32[32,64], index: 3, kind: input, shape index: {}]
  %s4 = inlined_call_operand.vmem [shape: f32[32,1], index: 4, kind: input, shape index: {}]
  %s5 = inlined_call_operand.vmem [shape: f32[1,32], index: 5, kind: input, shape index: {}]
  %s6 = inlined_call_operand.<no memory space> [shape: f32[1,1], index: 6, kind: input, shape index: {}]
  %s7 = inlined_call_operand.hbm [shape: f32[1,256], index: 7, kind: output, shape index: {}]
  %s8 = sld [smem:[#allocation0]]
  $region38: #{tpu_custom_call.1} parent=0
    _
  %s10 = ssub.s32 1, %s8
  %s11 = scalar_select 0, %s10, %s8
  %v12 = vstv %s6
  %13 = vst [vmem:[#allocation2] sm:$0x1] %v12
  $region1: #{tpu_custom_call.1} parent=0
    #allocation3 [shape = 'u8[1024]{0}', space=vmem, size = 0x400, scoped, tag = 'output window, operand 0, single buffered']
    #allocation4 [shape = 's32[1]{0}', space=sflag, size = 0x4, scoped, tag = 'scoped memory for tpu_custom_call.1']
    %14 = vsyncpa [#allocation4], 0
    // Predicated region
    $region2: #{tpu_custom_call.1} parent=1 // pred_check
      _
    $region3: #{tpu_custom_call.1} parent=1 // pred_check_branch
      %16 = sbr.rel (0) target = $region5
    $region4: #{tpu_custom_call.1} parent=1 // pred_region
      _
    $region5: #{tpu_custom_call.1} parent=1 // pred_fallthru
      _
    // Predicated region
    $region6: #{tpu_custom_call.1} parent=1 // pred_check
      _
    $region7: #{tpu_custom_call.1} parent=1 // pred_check_branch
      %18 = sbr.rel (0) target = $region9
    $region8: #{tpu_custom_call.1} parent=1 // pred_region
      _
    $region9: #{tpu_custom_call.1} parent=1 // pred_fallthru
      _
    // Predicated region
    $region10: #{tpu_custom_call.1} parent=1 // pred_check
      _
    $region11: #{tpu_custom_call.1} parent=1 // pred_check_branch
      %20 = sbr.rel (0) target = $region13
    $region12: #{tpu_custom_call.1} parent=1 // pred_region
      _
    $region13: #{tpu_custom_call.1} parent=1 // pred_fallthru
      _
    // Predicated region
    $region14: #{tpu_custom_call.1} parent=1 // pred_check
      _
    $region15: #{tpu_custom_call.1} parent=1 // pred_check_branch
      %22 = sbr.rel (0) target = $region17
    $region16: #{tpu_custom_call.1} parent=1 // pred_region
      _
    $region17: #{tpu_custom_call.1} parent=1 // pred_fallthru
      _
    // Predicated region
    $region18: #{tpu_custom_call.1} parent=1 // pred_check
      _
    $region19: #{tpu_custom_call.1} parent=1 // pred_check_branch
      %24 = sbr.rel (0) target = $region21
    $region20: #{tpu_custom_call.1} parent=1 // pred_region
      _
    $region21: #{tpu_custom_call.1} parent=1 // pred_fallthru
      _
    // Predicated region
    $region22: #{tpu_custom_call.1} parent=1 // pred_check
      _
    $region23: #{tpu_custom_call.1} parent=1 // pred_check_branch
      %26 = sbr.rel (0) target = $region25
    $region24: #{tpu_custom_call.1} parent=1 // pred_region
      _
    $region25: #{tpu_custom_call.1} parent=1 // pred_fallthru
      _
    // Predicated region
    $region26: #{tpu_custom_call.1} parent=1 // pred_check
      _
    $region27: #{tpu_custom_call.1} parent=1 // pred_check_branch
      %28 = sbr.rel (0) target = $region29
    $region28: #{tpu_custom_call.1} parent=1 // pred_region
      _
    $region29: #{tpu_custom_call.1} parent=1 // pred_fallthru
      _
    %v29 = vld [vmem:[%s1] sm:$0xff]
    %v30 = vld [vmem:[%s1 + $0x8] sm:$0xff]
    %v31 = vld [vmem:[%s1 + $0x10] sm:$0xff]
    %v32 = vld [vmem:[%s1 + $0x18] sm:$0xff]
    %v33 = vld [vmem:[%s1 + $0x20] sm:$0xff]
    %v34 = vld [vmem:[%s1 + $0x28] sm:$0xff]
    %v35 = vld [vmem:[%s1 + $0x30] sm:$0xff]
    %v36 = vld [vmem:[%s1 + $0x38] sm:$0xff]
    %v37 = vld [vmem:[%s0] sm:$0xff]
    %v38 = vld [vmem:[%s0 + $0x8] sm:$0xff]
    %v39 = vld [vmem:[%s0 + $0x10] sm:$0xff]
    %v40 = vld [vmem:[%s0 + $0x18] sm:$0xff]
    %v41 = vld [vmem:[%s2] sm:$0xff]
    %v42 = vld [vmem:[%s2 + $0x8] sm:$0xff]
    %v43 = vld [vmem:[%s2 + $0x10] sm:$0xff]
    %v44 = vld [vmem:[%s2 + $0x18] sm:$0xff]
    %v45 = vld [vmem:[%s2 + $0x20] sm:$0xff]
    %v46 = vld [vmem:[%s2 + $0x28] sm:$0xff]
    %v47 = vld [vmem:[%s2 + $0x30] sm:$0xff]
    %v48 = vld [vmem:[%s2 + $0x38] sm:$0xff]
    %50 = vset.pattern.permute.xlu0 0
    %51 = vperm.xlu0 %50, %v41
    %v52 = vpop.permute.xlu0 %51
    %55 = vset.pattern.permute.xlu0 0
    %56 = vperm.xlu0 %55, %v42
    %v57 = vpop.permute.xlu0 %56
    %60 = vset.pattern.permute.xlu0 0
    %61 = vperm.xlu0 %60, %v43
    %v62 = vpop.permute.xlu0 %61
    %65 = vset.pattern.permute.xlu0 0
    %66 = vperm.xlu0 %65, %v44
    %v67 = vpop.permute.xlu0 %66
    %70 = vset.pattern.permute.xlu0 0
    %71 = vperm.xlu0 %70, %v45
    %v72 = vpop.permute.xlu0 %71
    %75 = vset.pattern.permute.xlu0 0
    %76 = vperm.xlu0 %75, %v46
    %v77 = vpop.permute.xlu0 %76
    %80 = vset.pattern.permute.xlu0 0
    %81 = vperm.xlu0 %80, %v47
    %v82 = vpop.permute.xlu0 %81
    %85 = vset.pattern.permute.xlu0 0
    %86 = vperm.xlu0 %85, %v48
    %v87 = vpop.permute.xlu0 %86
    %vm89 = vcmask 130048
    %v91 = vsel %vm89, %v29, 0
    %v94 = vsel %vm89, %v30, 0
    %v97 = vsel %vm89, %v31, 0
    %v100 = vsel %vm89, %v32, 0
    %v103 = vsel %vm89, %v33, 0
    %v106 = vsel %vm89, %v34, 0
    %v109 = vsel %vm89, %v35, 0
    %v112 = vsel %vm89, %v36, 0
    %114 = vmatpush.msra.mxu0 0.0
    %115 = vmatpush.msra.mxu0 0.0
    %116 = vmatpush.msra.mxu0 0.0
    %117 = vmatpush.msra.mxu0 0.0
    %118 = vmatpush.msra.mxu0 0.0
    %119 = vmatpush.msra.mxu0 0.0
    %120 = vmatpush.msra.mxu0 0.0
    %121 = vmatpush.msra.mxu0 0.0
    %122 = vmatpush.msra.mxu0 0.0
    %123 = vmatpush.msra.mxu0 0.0
    %124 = vmatpush.msra.mxu0 0.0
    %125 = vmatpush.msra.mxu0 0.0
    %126 = vmatpush.msra.mxu0 0.0
    %127 = vmatpush.msra.mxu0 0.0
    %128 = vmatpush.msra.mxu0 %v39
    %129 = vmatpush.msra.mxu0 %v37
    %130 = vmatmul.f32.gmra.mxu0 %v91
    %v131 = vpop.f32.mrf.mxu0
    %v132 = vadd.f32 %v52, %v131
    %133 = vmatmul.f32.gmra.mxu0 %v94
    %v134 = vpop.f32.mrf.mxu0
    %v135 = vadd.f32 %v57, %v134
    %136 = vmatmul.f32.gmra.mxu0 %v97
    %v137 = vpop.f32.mrf.mxu0
    %v138 = vadd.f32 %v62, %v137
    %139 = vmatmul.f32.gmra.mxu0 %v100
    %v140 = vpop.f32.mrf.mxu0
    %v141 = vadd.f32 %v67, %v140
    %142 = vmatmul.f32.gmra.mxu0 %v103
    %v143 = vpop.f32.mrf.mxu0
    %v144 = vadd.f32 %v72, %v143
    %145 = vmatmul.f32.gmra.mxu0 %v106
    %v146 = vpop.f32.mrf.mxu0
    %v147 = vadd.f32 %v77, %v146
    %148 = vmatmul.f32.gmra.mxu0 %v109
    %v149 = vpop.f32.mrf.mxu0
    %v150 = vadd.f32 %v82, %v149
    %151 = vmatmul.f32.gmra.mxu0 %v112
    %v152 = vpop.f32.mrf.mxu0
    %v153 = vadd.f32 %v87, %v152
    %154 = vdwg.mxu0
    %155 = vmatpush.msra.mxu0 0.0
    %156 = vmatpush.msra.mxu0 0.0
    %157 = vmatpush.msra.mxu0 0.0
    %158 = vmatpush.msra.mxu0 0.0
    %159 = vmatpush.msra.mxu0 0.0
    %160 = vmatpush.msra.mxu0 0.0
    %161 = vmatpush.msra.mxu0 0.0
    %162 = vmatpush.msra.mxu0 0.0
    %163 = vmatpush.msra.mxu0 0.0
    %164 = vmatpush.msra.mxu0 0.0
    %165 = vmatpush.msra.mxu0 0.0
    %166 = vmatpush.msra.mxu0 0.0
    %167 = vmatpush.msra.mxu0 0.0
    %168 = vmatpush.msra.mxu0 0.0
    %169 = vmatpush.msra.mxu0 %v40
    %170 = vmatpush.msra.mxu0 %v38
    %171 = vmatmul.f32.gmra.mxu0 %v91
    %v172 = vpop.f32.mrf.mxu0
    %v173 = vadd.f32 %v52, %v172
    %174 = vmatmul.f32.gmra.mxu0 %v94
    %v175 = vpop.f32.mrf.mxu0
    %v176 = vadd.f32 %v57, %v175
    %177 = vmatmul.f32.gmra.mxu0 %v97
    %v178 = vpop.f32.mrf.mxu0
    %v179 = vadd.f32 %v62, %v178
    %180 = vmatmul.f32.gmra.mxu0 %v100
    %v181 = vpop.f32.mrf.mxu0
    %v182 = vadd.f32 %v67, %v181
    %183 = vmatmul.f32.gmra.mxu0 %v103
    %v184 = vpop.f32.mrf.mxu0
    %v185 = vadd.f32 %v72, %v184
    %186 = vmatmul.f32.gmra.mxu0 %v106
    %v187 = vpop.f32.mrf.mxu0
    %v188 = vadd.f32 %v77, %v187
    %189 = vmatmul.f32.gmra.mxu0 %v109
    %v190 = vpop.f32.mrf.mxu0
    %v191 = vadd.f32 %v82, %v190
    %192 = vmatmul.f32.gmra.mxu0 %v112
    %v193 = vpop.f32.mrf.mxu0
    %v194 = vadd.f32 %v87, %v193
    %195 = vdwg.mxu0
    %v196 = vmax.f32 %v132, 0.0
    %v197 = vmax.f32 %v173, 0.0
    %v198 = vmax.f32 %v135, 0.0
    %v199 = vmax.f32 %v176, 0.0
    %v200 = vmax.f32 %v138, 0.0
    %v201 = vmax.f32 %v179, 0.0
    %v202 = vmax.f32 %v141, 0.0
    %v203 = vmax.f32 %v182, 0.0
    %v204 = vmax.f32 %v144, 0.0
    %v205 = vmax.f32 %v185, 0.0
    %v206 = vmax.f32 %v147, 0.0
    %v207 = vmax.f32 %v188, 0.0
    %v208 = vmax.f32 %v150, 0.0
    %v209 = vmax.f32 %v191, 0.0
    %v210 = vmax.f32 %v153, 0.0
    %v211 = vmax.f32 %v194, 0.0
    %v212 = vld [vmem:[%s3] sm:$0xff]
    %v213 = vld [vmem:[%s3 + $0x8] sm:$0xff]
    %v214 = vld [vmem:[%s3 + $0x10] sm:$0xff]
    %v215 = vld [vmem:[%s3 + $0x18] sm:$0xff]
    %v216 = vld [vmem:[%s4] sm:$0xff]
    %v217 = vld [vmem:[%s4 + $0x8] sm:$0xff]
    %v218 = vld [vmem:[%s4 + $0x10] sm:$0xff]
    %v219 = vld [vmem:[%s4 + $0x18] sm:$0xff]
    %221 = vset.pattern.permute.xlu0 0
    %222 = vperm.xlu0 %221, %v216
    %v223 = vpop.permute.xlu0 %222
    %226 = vset.pattern.permute.xlu0 0
    %227 = vperm.xlu0 %226, %v217
    %v228 = vpop.permute.xlu0 %227
    %231 = vset.pattern.permute.xlu0 0
    %232 = vperm.xlu0 %231, %v218
    %v233 = vpop.permute.xlu0 %232
    %236 = vset.pattern.permute.xlu0 0
    %237 = vperm.xlu0 %236, %v219
    %v238 = vpop.permute.xlu0 %237
    %vm240 = vcmask 523264
    %v242 = vsel %vm240, %v212, 0
    %v245 = vsel %vm240, %v213, 0
    %v248 = vsel %vm240, %v214, 0
    %v251 = vsel %vm240, %v215, 0
    %253 = vmatpush.msra.mxu0 0.0
    %254 = vmatpush.msra.mxu0 0.0
    %255 = vmatpush.msra.mxu0 0.0
    %256 = vmatpush.msra.mxu0 0.0
    %257 = vmatpush.msra.mxu0 0.0
    %258 = vmatpush.msra.mxu0 0.0
    %259 = vmatpush.msra.mxu0 0.0
    %260 = vmatpush.msra.mxu0 0.0
    %261 = vmatpush.msra.mxu0 %v210
    %262 = vmatpush.msra.mxu0 %v208
    %263 = vmatpush.msra.mxu0 %v206
    %264 = vmatpush.msra.mxu0 %v204
    %265 = vmatpush.msra.mxu0 %v202
    %266 = vmatpush.msra.mxu0 %v200
    %267 = vmatpush.msra.mxu0 %v198
    %268 = vmatpush.msra.mxu0 %v196
    %269 = vmatmul.f32.gmra.mxu0 %v242
    %v270 = vpop.f32.mrf.mxu0
    %v271 = vadd.f32 %v223, %v270
    %272 = vmatmul.f32.gmra.mxu0 %v245
    %v273 = vpop.f32.mrf.mxu0
    %v274 = vadd.f32 %v228, %v273
    %275 = vmatmul.f32.gmra.mxu0 %v248
    %v276 = vpop.f32.mrf.mxu0
    %v277 = vadd.f32 %v233, %v276
    %278 = vmatmul.f32.gmra.mxu0 %v251
    %v279 = vpop.f32.mrf.mxu0
    %v280 = vadd.f32 %v238, %v279
    %281 = vdwg.mxu0
    %282 = vmatpush.msra.mxu0 0.0
    %283 = vmatpush.msra.mxu0 0.0
    %284 = vmatpush.msra.mxu0 0.0
    %285 = vmatpush.msra.mxu0 0.0
    %286 = vmatpush.msra.mxu0 0.0
    %287 = vmatpush.msra.mxu0 0.0
    %288 = vmatpush.msra.mxu0 0.0
    %289 = vmatpush.msra.mxu0 0.0
    %290 = vmatpush.msra.mxu0 %v211
    %291 = vmatpush.msra.mxu0 %v209
    %292 = vmatpush.msra.mxu0 %v207
    %293 = vmatpush.msra.mxu0 %v205
    %294 = vmatpush.msra.mxu0 %v203
    %295 = vmatpush.msra.mxu0 %v201
    %296 = vmatpush.msra.mxu0 %v199
    %297 = vmatpush.msra.mxu0 %v197
    %298 = vmatmul.f32.gmra.mxu0 %v242
    %v299 = vpop.f32.mrf.mxu0
    %v300 = vadd.f32 %v223, %v299
    %301 = vmatmul.f32.gmra.mxu0 %v245
    %v302 = vpop.f32.mrf.mxu0
    %v303 = vadd.f32 %v228, %v302
    %304 = vmatmul.f32.gmra.mxu0 %v248
    %v305 = vpop.f32.mrf.mxu0
    %v306 = vadd.f32 %v233, %v305
    %307 = vmatmul.f32.gmra.mxu0 %v251
    %v308 = vpop.f32.mrf.mxu0
    %v309 = vadd.f32 %v238, %v308
    %310 = vdwg.mxu0
    %v311 = vmax.f32 %v271, 0.0
    %v312 = vmax.f32 %v300, 0.0
    %v313 = vmax.f32 %v274, 0.0
    %v314 = vmax.f32 %v303, 0.0
    %v315 = vmax.f32 %v277, 0.0
    %v316 = vmax.f32 %v306, 0.0
    %v317 = vmax.f32 %v280, 0.0
    %v318 = vmax.f32 %v309, 0.0
    %v319 = vld [vmem:[%s5] sm:$0x1]
    %v320 = vld [vmem:[#allocation2] sm:$0x1]
    %322 = vset.pattern.permute.xlu0 0
    %323 = vperm.xlu0 %322, %v320
    %v324 = vpop.permute.xlu0 %323
    %v326 = vperm.slane %v324, 0
    %vm327 = vcmask 261120
    %v329 = vsel %vm327, %v319, 0
    %331 = vmatpush.msra.mxu0 0.0
    %332 = vmatpush.msra.mxu0 0.0
    %333 = vmatpush.msra.mxu0 0.0
    %334 = vmatpush.msra.mxu0 0.0
    %335 = vmatpush.msra.mxu0 0.0
    %336 = vmatpush.msra.mxu0 0.0
    %337 = vmatpush.msra.mxu0 0.0
    %338 = vmatpush.msra.mxu0 0.0
    %339 = vmatpush.msra.mxu0 0.0
    %340 = vmatpush.msra.mxu0 0.0
    %341 = vmatpush.msra.mxu0 0.0
    %342 = vmatpush.msra.mxu0 0.0
    %343 = vmatpush.msra.mxu0 %v317
    %344 = vmatpush.msra.mxu0 %v315
    %345 = vmatpush.msra.mxu0 %v313
    %346 = vmatpush.msra.mxu0 %v311
    %347 = vmatmul.f32.gmra.mxu0 %v329
    %v348 = vpop.f32.mrf.mxu0
    %v349 = vadd.f32 %v326, %v348
    %350 = vdwg.mxu0
    %351 = vmatpush.msra.mxu0 0.0
    %352 = vmatpush.msra.mxu0 0.0
    %353 = vmatpush.msra.mxu0 0.0
    %354 = vmatpush.msra.mxu0 0.0
    %355 = vmatpush.msra.mxu0 0.0
    %356 = vmatpush.msra.mxu0 0.0
    %357 = vmatpush.msra.mxu0 0.0
    %358 = vmatpush.msra.mxu0 0.0
    %359 = vmatpush.msra.mxu0 0.0
    %360 = vmatpush.msra.mxu0 0.0
    %361 = vmatpush.msra.mxu0 0.0
    %362 = vmatpush.msra.mxu0 0.0
    %363 = vmatpush.msra.mxu0 %v318
    %364 = vmatpush.msra.mxu0 %v316
    %365 = vmatpush.msra.mxu0 %v314
    %366 = vmatpush.msra.mxu0 %v312
    %367 = vmatmul.f32.gmra.mxu0 %v329
    %v368 = vpop.f32.mrf.mxu0
    %v369 = vadd.f32 %v326, %v368
    %370 = vdwg.mxu0
    %v373 = vrot.slane %v369, 7
    %vm374 = vcmask 1040384
    %v375 = vsel %vm374, %v349, %v373
    %v377 = vlaneseq
    %vm378 = vcmp.ge.s32.totalorder %v377, 0
    %vm379 = vcmp.lt.s32.totalorder %v377, 256
    %vm380 = vmand %vm378, %vm379
    %381 = vst.msk [vmem:[#allocation3] sm:$0x3] %vm380, %v375
    // Predicated region
    $region30: #{tpu_custom_call.1} parent=1 // pred_check
      _
    $region31: #{tpu_custom_call.1} parent=1 // pred_check_branch
      %383 = sbr.rel (0) target = $region33
    $region32: #{tpu_custom_call.1} parent=1 // pred_region
      %385 = vsyncadd [#allocation4], 0
      %s387 = sshll.u32 [#allocation3], 4
      %s388 = int_to_ptr.vmem [resolvable:$true] %s387
      %s389 = sshll.u32 %s7, 4
      %s390 = int_to_ptr.hbm [resolvable:$true] %s389
      %392 = dma.vmem_to_hbm [thread:$0]  %s388, 32, %s390, [#allocation4]
    $region33: #{tpu_custom_call.1} parent=1 // pred_fallthru
      _
    // Predicated region
    $region34: #{tpu_custom_call.1} parent=1 // pred_check
      _
    $region35: #{tpu_custom_call.1} parent=1 // pred_check_branch
      %394 = sbr.rel (0) target = $region37
    $region36: #{tpu_custom_call.1} parent=1 // pred_region
      %396 = dma.done [#allocation4], 32
    $region37: #{tpu_custom_call.1} parent=1 // pred_fallthru
      _
    %397 = vsyncpa [#allocation4], 1

</llo_original>
